<compile_context>
chip_gen: v7x
topology: tpu7x:2x2x1
jax: 0.10.0
libtpu: 0.0.40
codegen_flags: <defaults>
</compile_context>

<pallas_src>
import math
import functools

import jax
import jax.numpy as jnp
from jax import lax
from jax.experimental import pallas as pl
from jax.experimental.pallas import tpu as pltpu

LANES = 128
SUBLANES = 8
EPS = 1e-7                      # matches torch.clamp(pred_var, min=1e-07) in the module
TARGET_BLOCK_BYTES = 4 << 20    # per input, per pipeline buffer
CHUNK_ROWS = 64                 # rows per in-kernel sub-chunk (keeps temps vreg-resident)
HALF_LOG_2PI = 0.5 * math.log(2.0 * math.pi)


def _round_up(x, m):
    return ((x + m - 1) // m) * m


def _vmem_capacity_bytes():
    try:
        return int(pltpu.get_tpu_info().vmem_capacity_bytes)
    except Exception:
        return 64 << 20         # conservative: v7x physical VMEM per TensorCore


def _gnll_elementwise(pred_mean, pred_var, target, *, full):
    """Plain-jnp elementwise loss (fallback / reduction='none')."""
    var = jnp.maximum(pred_var.astype(jnp.float32), EPS)
    diff = target.astype(jnp.float32) - pred_mean.astype(jnp.float32)
    loss = 0.5 * (jnp.log(var) + diff * diff / var)
    if full:
        loss = loss + jnp.float32(HALF_LOG_2PI)
    return loss


def _gnll_kernel(mean_ref, var_ref, tgt_ref, out_ref, acc_ref, *,
                 row_tile, chunk_rows, k_blocks, valid_rows):
    """Streams one (row_tile, 128) tile per grid step and accumulates
    sum(log(var) + (t-m)^2 / var) into a vreg-shaped (8,128) accumulator.
    Emits one lane-dense (1,128) partial per shard."""
    s = pl.program_id(0)
    k = pl.program_id(1)

    @pl.when(k == 0)
    def _():
        acc_ref[...] = jnp.zeros_like(acc_ref)

    n_chunks = row_tile // chunk_rows

    if valid_rows is not None:
        # First global row of this tile + per-chunk row iota (hoisted out of the loop).
        blk_row0 = (s * k_blocks + k) * row_tile
        row_iota = lax.broadcasted_iota(jnp.int32, (chunk_rows, LANES), 0)

    def body(c, carry):
        start = pl.multiple_of(c * chunk_rows, chunk_rows)
        sl = pl.ds(start, chunk_rows)
        m = mean_ref[sl, :].astype(jnp.float32)
        v = jnp.maximum(var_ref[sl, :].astype(jnp.float32), EPS)
        t = tgt_ref[sl, :].astype(jnp.float32)
        d = t - m
        # The 0.5 scale and the mean division are applied once on the final scalar.
        loss = jnp.log(v) + (d * d) * pl.reciprocal(v, approx=False)
        if valid_rows is not None:
            # Zero contributions from rows past the end of the (rows,128) view
            # (the pipeline leaves the out-of-bounds tail of the last tile undefined).
            gid = row_iota + (blk_row0 + start)
            loss = jnp.where(gid < valid_rows, loss, 0.0)
        # Fold (chunk_rows,128) onto the (8,128) accumulator: vreg-aligned reshape
        # + pure VPU adds, one VMEM store per chunk.
        acc_ref[...] += loss.reshape(chunk_rows // SUBLANES, SUBLANES, LANES).sum(axis=0)
        return carry

    lax.fori_loop(0, n_chunks, body, 0)

    @pl.when(k == pl.num_programs(1) - 1)
    def _():
        # Single cross-sublane reduction per shard, lane-dense (1,128) store.
        out_ref[...] = acc_ref[...].sum(axis=0, keepdims=True)


def gaussian_nll_loss(pred_mean, pred_var, target, *, reduction="mean", full=False,
                      min_kernel_elems=1 << 17):
    """Pallas-TPU forward pass of CustomGaussianNLLLoss."""
    assert pred_mean.shape == pred_var.shape == target.shape

    if reduction not in ("mean", "sum"):
        # TODO(synk): reduction='none' is a pure elementwise map with a full-size
        # output; served by plain jnp (nothing to fuse into the streaming reduction).
        return _gnll_elementwise(pred_mean, pred_var, target, full=full)

    total_n = int(pred_mean.size)
    if total_n < max(int(min_kernel_elems), 1):
        # Small-input fallback: pallas_call launch cost would dominate.
        loss = _gnll_elementwise(pred_mean, pred_var, target, full=full)
        return loss.mean() if reduction == "mean" else loss.sum()

    # ---- Flatten to a lane-dense (rows, 128) view (free reshape) ---------------
    mean_f = pred_mean.reshape(-1)
    var_f = pred_var.reshape(-1)
    tgt_f = target.reshape(-1)

    n128 = _round_up(total_n, LANES)
    if n128 != total_n:
        # Rare path (total size not a multiple of 128): pad with neutral elements
        # (mean=0, var=1, target=0 -> exactly zero loss).  This is the only case
        # that still costs an extra copy of the inputs.
        pad = n128 - total_n
        mean_f = jnp.pad(mean_f, (0, pad), constant_values=0)
        var_f = jnp.pad(var_f, (0, pad), constant_values=1)
        tgt_f = jnp.pad(tgt_f, (0, pad), constant_values=0)

    rows = n128 // LANES
    mean2d = mean_f.reshape(rows, LANES)
    var2d = var_f.reshape(rows, LANES)
    tgt2d = tgt_f.reshape(rows, LANES)

    # ---- Tiling -----------------------------------------------------------------
    itemsize = max(jnp.dtype(x.dtype).itemsize for x in (pred_mean, pred_var, target))
    max_row_tile = max(512, (TARGET_BLOCK_BYTES // (LANES * itemsize))
                       // CHUNK_ROWS * CHUNK_ROWS)

    num_shards = 2 if rows >= 2048 else 1   # v7x megacore split (harmless on 1-TC chips)
    k_blocks = pl.cdiv(rows, num_shards * max_row_tile)

    def _tile(n_blocks):
        rt = pl.cdiv(rows, n_blocks)
        return _round_up(rt, CHUNK_ROWS) if rt > CHUNK_ROWS else _round_up(rt, SUBLANES)

    row_tile = _tile(num_shards * k_blocks)
    # Guarantee every tile starts in bounds (never emit a fully out-of-bounds tile).
    while num_shards * k_blocks > 1 and (num_shards * k_blocks - 1) * row_tile >= rows:
        if k_blocks > 1:
            k_blocks -= 1
        else:
            num_shards = 1
        row_tile = _tile(num_shards * k_blocks)

    chunk_rows = CHUNK_ROWS if row_tile >= CHUNK_ROWS else row_tile
    covered_rows = num_shards * k_blocks * row_tile
    valid_rows = rows if covered_rows != rows else None   # mask only when needed

    in_blk = pl.BlockSpec((row_tile, LANES), lambda s, k: (s * k_blocks + k, 0))
    out_blk = pl.BlockSpec((1, LANES), lambda s, k: (s, 0))

    # ---- VMEM budget / cost hint --------------------------------------------------
    block_bytes = row_tile * LANES * itemsize
    vmem_cap = _vmem_capacity_bytes()
    vmem_need = 3 * 2 * block_bytes + (2 << 20)
    vmem_limit = min(max(vmem_need + (16 << 20), 32 << 20),
                     max(vmem_cap - (8 << 20), 16 << 20))

    bytes_in = sum(int(x.size) * jnp.dtype(x.dtype).itemsize
                   for x in (pred_mean, pred_var, target))
    cost = pl.CostEstimate(flops=7 * total_n,
                           transcendentals=2 * total_n,
                           bytes_accessed=bytes_in + num_shards * LANES * 4)

    kernel = functools.partial(_gnll_kernel, row_tile=row_tile,
                               chunk_rows=chunk_rows, k_blocks=k_blocks,
                               valid_rows=valid_rows)

    partials = pl.pallas_call(
        kernel,
        out_shape=jax.ShapeDtypeStruct((num_shards, LANES), jnp.float32),
        grid_spec=pltpu.PrefetchScalarGridSpec(
            num_scalar_prefetch=0,
            grid=(num_shards, k_blocks),
            in_specs=[in_blk, in_blk, in_blk],
            out_specs=out_blk,
            scratch_shapes=[pltpu.VMEM((SUBLANES, LANES), jnp.float32)],
        ),
        compiler_params=pltpu.CompilerParams(
            dimension_semantics=("parallel", "arbitrary"),
            vmem_limit_bytes=int(vmem_limit)),
        cost_estimate=cost,
    )(mean2d, var2d, tgt2d)

    total = 0.5 * jnp.sum(partials, dtype=jnp.float32)
    if reduction == "mean":
        out = total / jnp.float32(total_n)
        if full:
            out = out + jnp.float32(HALF_LOG_2PI)
        return out
    if full:
        total = total + jnp.float32(HALF_LOG_2PI * total_n)
    return total


if __name__ == "__main__":
    key = jax.random.PRNGKey(0)

    def make(shape, kk):
        k1, k2, k3 = jax.random.split(kk, 3)
        m = jax.random.normal(k1, shape, dtype=jnp.float32)
        v = jax.nn.softplus(jax.random.normal(k2, shape, dtype=jnp.float32)) + 0.05
        t = jax.random.normal(k3, shape, dtype=jnp.float32)
        return m, v, t

    def ref(m, v, t, *, reduction, full):
        var = jnp.maximum(v.astype(jnp.float32), EPS)
        diff = t.astype(jnp.float32) - m.astype(jnp.float32)
        loss = 0.5 * (jnp.log(var) + diff * diff / var)
        if full:
            loss = loss + 0.5 * math.log(2.0 * math.pi)
        return loss.mean() if reduction == "mean" else loss.sum()

    keys = jax.random.split(key, 4)

    # 1) Module-sized NCHW input (batch=2, channels=4, 16x16), forced through the kernel.
    m, v, t = make((2, 4, 16, 16), keys[0])
    for red, full in (("mean", False), ("sum", True), ("mean", True)):
        out = jax.block_until_ready(
            gaussian_nll_loss(m, v, t, reduction=red, full=full, min_kernel_elems=0))
        r = ref(m, v, t, reduction=red, full=full)
        assert jnp.allclose(out, r, rtol=1e-5, atol=1e-5), (red, full, out, r)

    # 2) Ragged total size (not a multiple of 128): tiny neutral pad + row masking.
    m, v, t = make((3, 5, 7, 11), keys[1])
    out = jax.block_until_ready(
        gaussian_nll_loss(m, v, t, reduction="mean", full=False, min_kernel_elems=0))
    r = ref(m, v, t, reduction="mean", full=False)
    assert jnp.allclose(out, r, rtol=1e-5, atol=1e-5), (out, r)

    # 3) Row count not a multiple of the tile: exercises the masked chunk loop.
    m, v, t = make((2, 3, 99, 128), keys[2])
    out = jax.block_until_ready(
        gaussian_nll_loss(m, v, t, reduction="sum", full=False, min_kernel_elems=0))
    r = ref(m, v, t, reduction="sum", full=False)
    assert jnp.allclose(out, r, rtol=1e-4, atol=1e-4), (out, r)

    # 4) Medium input through the default path: 2-shard parallel grid, no masking.
    m, v, t = make((8, 16, 64, 64), keys[3])
    out = jax.block_until_ready(gaussian_nll_loss(m, v, t, reduction="mean", full=False))
    r = ref(m, v, t, reduction="mean", full=False)
    assert jnp.allclose(out, r, rtol=1e-5, atol=1e-5), (out, r)

    # 5) Small-input jnp fallback path (default threshold).
    m, v, t = make((2, 4, 16, 16), keys[0])
    out = jax.block_until_ready(gaussian_nll_loss(m, v, t, reduction="mean", full=False))
    r = ref(m, v, t, reduction="mean", full=False)
    assert jnp.allclose(out, r, rtol=1e-5, atol=1e-5), (out, r)

    print("KERNEL_OK")
</pallas_src>

<mosaic_0001>
module attributes {stable_mosaic.version = 11 : i64} {
  func.func @_gnll_kernel(%arg0: i32, %arg1: i32, %arg2: memref<16x128xf32, #tpu.memory_space<vmem>>, %arg3: memref<16x128xf32, #tpu.memory_space<vmem>>, %arg4: memref<16x128xf32, #tpu.memory_space<vmem>>, %arg5: memref<1x128xf32, #tpu.memory_space<vmem>>, %arg6: memref<8x128xf32, #tpu.memory_space<vmem>>) attributes {dimension_semantics = [#tpu.dimension_semantics<parallel>, #tpu.dimension_semantics<arbitrary>], iteration_bounds = array<i64: 1, 1>, scalar_prefetch = 0 : i64, scratch_operands = 1 : i64, tpu.core_type = #tpu.core_type<tc>, window_params = [{transform_indices = @transform_0, window_bounds = array<i64: 16, 128>}, {transform_indices = @transform_1, window_bounds = array<i64: 16, 128>}, {transform_indices = @transform_2, window_bounds = array<i64: 16, 128>}, {transform_indices = @transform_3, window_bounds = array<i64: 1, 128>}]} {
    %c0_i32 = arith.constant 0 : i32
    %0 = arith.cmpi eq, %arg1, %c0_i32 : i32
    %1 = arith.extui %0 : i1 to i32
    %c0_i32_0 = arith.constant 0 : i32
    %2 = arith.cmpi ne, %1, %c0_i32_0 : i32
    scf.if %2 {
      %cst_11 = arith.constant 0.000000e+00 : f32
      %27 = vector.broadcast %cst_11 : f32 to vector<8x128xf32>
      %c0_12 = arith.constant 0 : index
      %c0_13 = arith.constant 0 : index
      %28 = vector.load %arg6[%c0_12, %c0_13] : memref<8x128xf32, #tpu.memory_space<vmem>>, vector<8x128xf32>
      tpu.vector_store %arg6[%c0_12, %c0_13], %27 {strides = array<i32>} : memref<8x128xf32, #tpu.memory_space<vmem>>, vector<8x128xf32>,
    } else {
    }
    %c0_i32_1 = arith.constant 0 : i32
    %c16_i32 = arith.constant 16 : i32
    %3 = arith.muli %c0_i32_1, %c16_i32 : i32
    %4 = tpu.assume_multiple %3, 16 : i32
    %5 = arith.index_cast %4 : i32 to index
    %c0 = arith.constant 0 : index
    %6 = vector.load %arg2[%5, %c0] : memref<16x128xf32, #tpu.memory_space<vmem>>, vector<16x128xf32>
    %7 = arith.index_cast %4 : i32 to index
    %c0_2 = arith.constant 0 : index
    %8 = vector.load %arg3[%7, %c0_2] : memref<16x128xf32, #tpu.memory_space<vmem>>, vector<16x128xf32>
    %cst = arith.constant 1.000000e-07 : f32
    %9 = vector.broadcast %cst : f32 to vector<16x128xf32>
    %10 = arith.maximumf %8, %9 : vector<16x128xf32>
    %11 = arith.index_cast %4 : i32 to index
    %c0_3 = arith.constant 0 : index
    %12 = vector.load %arg4[%11, %c0_3] : memref<16x128xf32, #tpu.memory_space<vmem>>, vector<16x128xf32>
    %13 = arith.subf %12, %6 : vector<16x128xf32>
    %14 = math.log %10 : vector<16x128xf32>
    %15 = arith.mulf %13, %13 : vector<16x128xf32>
    %16 = tpu.reciprocal %10 : vector<16x128xf32> -> vector<16x128xf32>
    %17 = arith.mulf %15, %16 : vector<16x128xf32>
    %18 = arith.addf %14, %17 : vector<16x128xf32>
    %c0_4 = arith.constant 0 : index
    %c0_5 = arith.constant 0 : index
    %19 = vector.load %arg6[%c0_4, %c0_5] : memref<8x128xf32, #tpu.memory_space<vmem>>, vector<8x128xf32>
    %20 = vector.shape_cast %18 : vector<16x128xf32> to vector<2x8x128xf32>
    %cst_6 = arith.constant dense<0.000000e+00> : vector<8x128xf32>
    %21 = vector.multi_reduction <add>, %20, %cst_6 [0] : vector<2x8x128xf32> to vector<8x128xf32>
    %22 = arith.addf %19, %21 : vector<8x128xf32>
    %c0_7 = arith.constant 0 : index
    %c0_8 = arith.constant 0 : index
    %23 = vector.load %arg6[%c0_7, %c0_8] : memref<8x128xf32, #tpu.memory_space<vmem>>, vector<8x128xf32>
    tpu.vector_store %arg6[%c0_7, %c0_8], %22 {strides = array<i32>} : memref<8x128xf32, #tpu.memory_space<vmem>>, vector<8x128xf32>,
    %c1_i32 = arith.constant 1 : i32
    %c0_i32_9 = arith.constant 0 : i32
    %24 = arith.cmpi eq, %arg1, %c0_i32_9 : i32
    %25 = arith.extui %24 : i1 to i32
    %c0_i32_10 = arith.constant 0 : i32
    %26 = arith.cmpi ne, %25, %c0_i32_10 : i32
    scf.if %26 {
      %c0_11 = arith.constant 0 : index
      %c0_12 = arith.constant 0 : index
      %27 = vector.load %arg6[%c0_11, %c0_12] : memref<8x128xf32, #tpu.memory_space<vmem>>, vector<8x128xf32>
      %cst_13 = arith.constant dense<0.000000e+00> : vector<128xf32>
      %28 = vector.multi_reduction <add>, %27, %cst_13 [0] : vector<8x128xf32> to vector<128xf32>
      %29 = vector.shape_cast %28 : vector<128xf32> to vector<1x128xf32>
      %c0_14 = arith.constant 0 : index
      %c0_15 = arith.constant 0 : index
      %30 = vector.load %arg5[%c0_14, %c0_15] : memref<1x128xf32, #tpu.memory_space<vmem>>, vector<1x128xf32>
      tpu.vector_store %arg5[%c0_14, %c0_15], %29 {strides = array<i32>} : memref<1x128xf32, #tpu.memory_space<vmem>>, vector<1x128xf32>,
    } else {
    }
    return
  }
  func.func @transform_0(%arg0: i32, %arg1: i32) -> (i32, i32) {
    %c1_i32 = arith.constant 1 : i32
    %0 = arith.muli %arg0, %c1_i32 : i32
    %1 = arith.addi %0, %arg1 : i32
    %c0_i32 = arith.constant 0 : i32
    %c0_i32_0 = arith.constant 0 : i32
    return %1, %c0_i32 : i32, i32
  }
  func.func @transform_1(%arg0: i32, %arg1: i32) -> (i32, i32) {
    %c1_i32 = arith.constant 1 : i32
    %0 = arith.muli %arg0, %c1_i32 : i32
    %1 = arith.addi %0, %arg1 : i32
    %c0_i32 = arith.constant 0 : i32
    %c0_i32_0 = arith.constant 0 : i32
    return %1, %c0_i32 : i32, i32
  }
  func.func @transform_2(%arg0: i32, %arg1: i32) -> (i32, i32) {
    %c1_i32 = arith.constant 1 : i32
    %0 = arith.muli %arg0, %c1_i32 : i32
    %1 = arith.addi %0, %arg1 : i32
    %c0_i32 = arith.constant 0 : i32
    %c0_i32_0 = arith.constant 0 : i32
    return %1, %c0_i32 : i32, i32
  }
  func.func @transform_3(%arg0: i32, %arg1: i32) -> (i32, i32) {
    %c0_i32 = arith.constant 0 : i32
    %c0_i32_0 = arith.constant 0 : i32
    return %arg0, %c0_i32 : i32, i32
  }
}

</mosaic_0001>

<llo_original>
// kernel: tpu_custom_call.1
$region0: #{tpu_custom_call.1}
  #allocation0 [shape = 'u32[]', space=smem, size = 0x4, offset = 0x4, fixed_abs, tag = 'smem constant byte address 0x4 - core index']
  #allocation1 [shape = 'u32[144,128]{1,0:T(1,128)}', space=vmem, size = 0x12000, scoped, tag = 'internal scratch']
  #allocation2 [shape = 'f32[8,128]{1,0:T(8,128)}', space=vmem, size = 0x1000, scoped, tag = 'scratch operand']
  %s0 = inlined_call_operand.hbm [shape: f32[16,128], index: 0, kind: input, shape index: {}]
  %s1 = inlined_call_operand.hbm [shape: f32[16,128], index: 1, kind: input, shape index: {}]
  %s2 = inlined_call_operand.hbm [shape: f32[16,128], index: 2, kind: input, shape index: {}]
  %s3 = inlined_call_operand.hbm [shape: f32[1,128], index: 3, kind: output, shape index: {}]
  %s4 = sld [smem:[#allocation0]]
  $region42: #{tpu_custom_call.1} parent=0
    _
  %s6 = ssub.s32 1, %s4
  %s7 = scalar_select 0, %s6, %s4
  $region1: #{tpu_custom_call.1} parent=0
    #allocation3 [shape = 'u8[8192]{0}', space=vmem, size = 0x2000, scoped, tag = 'input window, operand 0, single buffered']
    #allocation4 [shape = 's32[1]{0}', space=sflag, size = 0x4, scoped, tag = 'scoped memory for tpu_custom_call.1']
    #allocation5 [shape = 's32[1]{0}', space=sflag, size = 0x4, scoped, tag = 'scoped memory for tpu_custom_call.1']
    #allocation6 [shape = 'u8[8192]{0}', space=vmem, size = 0x2000, scoped, tag = 'input window, operand 1, single buffered']
    #allocation7 [shape = 's32[1]{0}', space=sflag, size = 0x4, scoped, tag = 'scoped memory for tpu_custom_call.1']
    #allocation8 [shape = 'u8[8192]{0}', space=vmem, size = 0x2000, scoped, tag = 'input window, operand 2, single buffered']
    #allocation9 [shape = 'u8[512]{0}', space=vmem, size = 0x400, scoped, tag = 'output window, operand 0, single buffered']
    %8 = vsyncpa [#allocation4], 0
    %9 = vsyncpa [#allocation7], 0
    %10 = vsyncpa [#allocation5], 0
    // Predicated region
    $region2: #{tpu_custom_call.1} parent=1 // pred_check
      _
    $region3: #{tpu_custom_call.1} parent=1 // pred_check_branch
      %12 = sbr.rel (0) target = $region5
    $region4: #{tpu_custom_call.1} parent=1 // pred_region
      %s13 = sadd.s32 0, 0
      %s14 = smul.u32 2, %s13
      %s16 = ssub.s32 256, 256
      %17 = vsyncadd [#allocation4], %s16
      %s18 = smul.addr %s14, 128
      %s19 = scalar_lea.hbm %s0, %s18
      %s20 = sshll.u32 [#allocation3], 4
      %s21 = int_to_ptr.vmem [resolvable:$true] %s20
      %26 = dma.hbm_to_vmem [thread:$0]  %s19, 256, %s21, [#allocation4], 128, 128, 8
    $region5: #{tpu_custom_call.1} parent=1 // pred_fallthru
      _
    // Predicated region
    $region6: #{tpu_custom_call.1} parent=1 // pred_check
      _
    $region7: #{tpu_custom_call.1} parent=1 // pred_check_branch
      %28 = sbr.rel (0) target = $region9
    $region8: #{tpu_custom_call.1} parent=1 // pred_region
      %s29 = sadd.s32 0, 0
      %s30 = smul.u32 2, %s29
      %s32 = ssub.s32 256, 256
      %33 = vsyncadd [#allocation7], %s32
      %s34 = smul.addr %s30, 128
      %s35 = scalar_lea.hbm %s1, %s34
      %s36 = sshll.u32 [#allocation6], 4
      %s37 = int_to_ptr.vmem [resolvable:$true] %s36
      %42 = dma.hbm_to_vmem [thread:$0]  %s35, 256, %s37, [#allocation7], 128, 128, 8
    $region9: #{tpu_custom_call.1} parent=1 // pred_fallthru
      _
    // Predicated region
    $region10: #{tpu_custom_call.1} parent=1 // pred_check
      _
    $region11: #{tpu_custom_call.1} parent=1 // pred_check_branch
      %44 = sbr.rel (0) target = $region13
    $region12: #{tpu_custom_call.1} parent=1 // pred_region
      %s45 = sadd.s32 0, 0
      %s46 = smul.u32 2, %s45
      %s48 = ssub.s32 256, 256
      %49 = vsyncadd [#allocation7], %s48
      %s50 = smul.addr %s46, 128
      %s51 = scalar_lea.hbm %s2, %s50
      %s52 = sshll.u32 [#allocation8], 4
      %s53 = int_to_ptr.vmem [resolvable:$true] %s52
      %58 = dma.hbm_to_vmem [thread:$0]  %s51, 256, %s53, [#allocation7], 128, 128, 8
    $region13: #{tpu_custom_call.1} parent=1 // pred_fallthru
      _
    // Predicated region
    $region14: #{tpu_custom_call.1} parent=1 // pred_check
      _
    $region15: #{tpu_custom_call.1} parent=1 // pred_check_branch
      %60 = sbr.rel (0) target = $region17
    $region16: #{tpu_custom_call.1} parent=1 // pred_region
      %61 = dma.done [#allocation4], 256
    $region17: #{tpu_custom_call.1} parent=1 // pred_fallthru
      _
    // Predicated region
    $region18: #{tpu_custom_call.1} parent=1 // pred_check
      _
    $region19: #{tpu_custom_call.1} parent=1 // pred_check_branch
      %63 = sbr.rel (0) target = $region21
    $region20: #{tpu_custom_call.1} parent=1 // pred_region
      %64 = dma.done [#allocation7], 256
    $region21: #{tpu_custom_call.1} parent=1 // pred_fallthru
      _
    // Predicated region
    $region22: #{tpu_custom_call.1} parent=1 // pred_check
      _
    $region23: #{tpu_custom_call.1} parent=1 // pred_check_branch
      %66 = sbr.rel (0) target = $region25
    $region24: #{tpu_custom_call.1} parent=1 // pred_region
      %67 = dma.done [#allocation7], 256
    $region25: #{tpu_custom_call.1} parent=1 // pred_fallthru
      _
    %s68 = sadd.s32 0, 0
    %s69 = smul.u32 2, %s68
    %s70 = sadd.s32 0, 0
    %s71 = smul.u32 2, %s70
    %s72 = sadd.s32 0, 0
    %s73 = smul.u32 2, %s72
    %p74 = scmp.eq.s32.totalorder 0, 0
    // Predicated region
    $region26: #{tpu_custom_call.1} parent=1 // pred_check
      %p75 = pneg %p74
    $region27: #{tpu_custom_call.1} parent=1 // pred_check_branch
      %77 = sbr.rel (%p75) target = $region29
    $region28: #{tpu_custom_call.1} parent=1 // pred_region
      %78 = vst [vmem:[#allocation2] sm:$0xff] 0.0
    $region29: #{tpu_custom_call.1} parent=1 // pred_fallthru
      _
    %v79 = vld [vmem:[#allocation3] sm:$0xff]
    %v80 = vld [vmem:[#allocation3 + $0x8] sm:$0xff]
    %v81 = vld [vmem:[#allocation6] sm:$0xff]
    %v82 = vld [vmem:[#allocation6 + $0x8] sm:$0xff]
    %v83 = vmax.f32 %v81, 1e-07
    %v84 = vmax.f32 %v82, 1e-07
    %v85 = vld [vmem:[#allocation8] sm:$0xff]
    %v86 = vld [vmem:[#allocation8 + $0x8] sm:$0xff]
    %v87 = vsub.f32 %v85, %v79
    %v88 = vsub.f32 %v86, %v80
    %v89 = vlog2.pop %v83
    %v90 = vmul.f32 %v89, 0.6931472
    %v91 = vlog2.pop %v84
    %v92 = vmul.f32 %v91, 0.6931472
    %v93 = vmul.f32 %v87, %v87
    %v94 = vmul.f32 %v88, %v88
    %v95 = vrcp.pop %v83
    %v96 = vrcp.pop %v84
    %v97 = vmul.f32 %v93, %v95
    %v98 = vmul.f32 %v94, %v96
    %v99 = vadd.f32 %v90, %v97
    %v100 = vadd.f32 %v92, %v98
    %v101 = vld [vmem:[#allocation2] sm:$0xff]
    %v102 = vadd.f32 %v99, %v100
    %v103 = vadd.f32 %v101, %v102
    %104 = vst [vmem:[#allocation2] sm:$0xff] %v103
    // Predicated region
    $region30: #{tpu_custom_call.1} parent=1 // pred_check
      %p105 = pneg %p74
    $region31: #{tpu_custom_call.1} parent=1 // pred_check_branch
      %107 = sbr.rel (%p105) target = $region33
    $region32: #{tpu_custom_call.1} parent=1 // pred_region
      %v108 = vld [vmem:[#allocation2] sm:$0xff]
      %v109 = vrot.slane %v108, 4
      %v110 = vadd.f32 %v108, %v109
      %v111 = vrot.slane %v110, 2
      %v112 = vadd.f32 %v110, %v111
      %v113 = vrot.slane %v112, 1
      %v114 = vadd.f32 %v112, %v113
      %115 = vst [vmem:[#allocation9] sm:$0x1] %v114
    $region33: #{tpu_custom_call.1} parent=1 // pred_fallthru
      _
    // Predicated region
    $region34: #{tpu_custom_call.1} parent=1 // pred_check
      _
    $region35: #{tpu_custom_call.1} parent=1 // pred_check_branch
      %117 = sbr.rel (0) target = $region37
    $region36: #{tpu_custom_call.1} parent=1 // pred_region
      %s119 = ssub.s32 16, 16
      %120 = vsyncadd [#allocation5], %s119
      %s122 = sshll.u32 [#allocation9], 4
      %s123 = int_to_ptr.vmem [resolvable:$true] %s122
      %125 = dma.vmem_to_hbm [thread:$0]  %s123, 16, %s3, [#allocation5]
    $region37: #{tpu_custom_call.1} parent=1 // pred_fallthru
      _
    // Predicated region
    $region38: #{tpu_custom_call.1} parent=1 // pred_check
      _
    $region39: #{tpu_custom_call.1} parent=1 // pred_check_branch
      %127 = sbr.rel (0) target = $region41
    $region40: #{tpu_custom_call.1} parent=1 // pred_region
      %128 = dma.done [#allocation5], 16
    $region41: #{tpu_custom_call.1} parent=1 // pred_fallthru
      _
    %129 = vsyncpa [#allocation4], 1
    %130 = vsyncpa [#allocation7], 1
    %131 = vsyncpa [#allocation5], 1

</llo_original>
